<compile_context>
chip_gen: v7x
topology: tpu7x:2x2x1
jax: 0.10.0
libtpu: 0.0.40
codegen_flags: <defaults>
</compile_context>

<pallas_src>
import functools

import jax
import jax.numpy as jnp
from jax.experimental import pallas as pl
from jax.experimental.pallas import tpu as pltpu

LN_EPS = 1e-5  # PyTorch nn.LayerNorm default


def _round_up(x, m):
    return ((x + m - 1) // m) * m


def _cdiv(a, b):
    return -(-a // b)


def _vmem_capacity_bytes():
    """Physical per-core VMEM; conservative (v7x-sized) fallback if unknown."""
    try:
        return int(pltpu.get_tpu_info().vmem_capacity_bytes)
    except Exception:
        return 64 * 1024 * 1024


def _patch_embed_kernel(x_ref, w_ref, prm_ref, o_ref, *, e_real):
    # x_ref: (tm, K_pad)  w_ref: (K_pad, E_pad)  prm_ref: (3, E_pad) f32
    # o_ref: (tm, E_pad)
    # Patch projection (== Conv2d with kernel=stride=patch_size) on the MXU;
    # bf16/native operands, f32 accumulation.
    y = jnp.dot(x_ref[...], w_ref[...], preferred_element_type=jnp.float32)

    prm = prm_ref[...]                                   # (3, E_pad) f32
    bias, gamma, beta = prm[0:1, :], prm[1:2, :], prm[2:3, :]
    y = y + bias                                         # padded E cols stay 0

    # LayerNorm over the real embed_dim, two-pass variance (PyTorch numerics).
    # Padded E columns are exact zeros in y; they contribute 0 to the mean sum,
    # and are masked out of the centered values so they contribute 0 to var.
    inv_e = jnp.float32(1.0 / e_real)
    mu = jnp.sum(y, axis=-1, keepdims=True) * inv_e
    d = y - mu
    if e_real != y.shape[-1]:
        lane = jax.lax.broadcasted_iota(jnp.int32, y.shape, dimension=1)
        d = jnp.where(lane < e_real, d, 0.0)
    var = jnp.sum(d * d, axis=-1, keepdims=True) * inv_e
    y_hat = d * jax.lax.rsqrt(var + LN_EPS)              # rsqrt -> EUP

    o_ref[...] = (y_hat * gamma + beta).astype(o_ref.dtype)


def _patchify_nchw(x, patch_size):
    """NCHW image -> (B, num_patches, C*p*p), patch vector ordered (C, ph, pw)."""
    B, C, H, W = x.shape
    p = patch_size
    nH, nW = H // p, W // p
    x = x.reshape(B, C, nH, p, nW, p)
    x = x.transpose(0, 2, 4, 1, 3, 5)          # (B, nH, nW, C, p, p)
    return x.reshape(B, nH * nW, C * p * p)


@functools.partial(jax.jit, static_argnames=("patch_size", "cast_to_bf16"))
def patch_embedding(x, conv_w, conv_b, ln_gamma, ln_beta, *, patch_size,
                    cast_to_bf16=True):
    """Forward pass of PatchEmbedding.

    x       : (B, C, H, W)  NCHW, matching the PyTorch module
    conv_w  : (E, C, p, p)  Conv2d weight
    conv_b  : (E,)          Conv2d bias
    ln_gamma: (E,)          LayerNorm weight
    ln_beta : (E,)          LayerNorm bias
    returns : (B, num_patches, E)
    """
    B, C, H, W = x.shape
    E = conv_w.shape[0]
    p = patch_size
    num_patches = (H // p) * (W // p)
    K = C * p * p
    M = B * num_patches

    out_dtype = x.dtype
    # MXU fast path: bf16 operands, f32 accumulation + f32 LayerNorm epilogue.
    compute_dtype = (jnp.bfloat16
                     if (cast_to_bf16 and x.dtype == jnp.float32) else x.dtype)
    in_itemsize = jnp.dtype(compute_dtype).itemsize
    out_itemsize = jnp.dtype(out_dtype).itemsize

    # Lane-align the GEMM dims (multiples of 128) -> unmasked stores, full MXU.
    # TODO(synk): on v6e/v7x (2x256x256 MXU) round large K/E up to 256 instead.
    K_pad = _round_up(K, 128)
    E_pad = _round_up(E, 128)

    # --- Per-generation VMEM sizing (128 MiB on v5e/v6e, 64 MiB/TC on v7x) ---
    vmem_cap = _vmem_capacity_bytes()
    if vmem_cap >= 128 * 1024 * 1024:          # v5e / v6e
        vmem_budget = 88 * 1024 * 1024
        vmem_limit = 104 * 1024 * 1024
        tm_start = 2048
    else:                                       # v7x: leave ~8 MiB headroom for
        vmem_budget = 40 * 1024 * 1024          # Mosaic internal scratch.
        vmem_limit = min(56 * 1024 * 1024, vmem_cap)
        tm_start = 1024

    def _tiles_bytes(t):
        return (2 * t * K_pad * in_itemsize     # double-buffered patches tile
                + 2 * t * E_pad * out_itemsize  # double-buffered output tile
                + K_pad * E_pad * in_itemsize   # single-buffered weight
                + 3 * E_pad * 4                 # single-buffered params
                + 2 * t * E_pad * 4)            # f32 epilogue temps (y, d)

    tm = tm_start
    while tm > 8 and _tiles_bytes(tm) > vmem_budget:
        tm //= 2

    # Guarantee >= 2 grid steps (both v7x TensorCores get work) and prefer an
    # even step count to avoid a one-step tail imbalance.
    if M <= tm:
        tm = _round_up(_cdiv(M, 2), 8) if M > 8 else _round_up(max(M, 1), 8)
    steps = _cdiv(M, tm)
    if steps > 1 and steps % 2 == 1:
        tm_even = max(8, _round_up(_cdiv(M, steps + 1), 8))
        if _cdiv(M, tm_even) % 2 == 0:
            tm = tm_even
    M_pad = _round_up(M, tm)

    # Patch extraction (strided conv == non-overlapping patches) + a SINGLE pad
    # covering both K (lane) and M (tile) padding.  allow_input_fusion lets XLA
    # fuse this producer chain into the pallas_call input DMA instead of
    # materializing an extra HBM copy of the activation.
    # TODO(synk): for very large images, gather patches in-kernel (grid over
    # (B, nH) with manual DMA) to drop even the fused producer cost.
    patches2d = _patchify_nchw(x.astype(compute_dtype), p).reshape(M, K)
    if (M_pad, K_pad) != (M, K):
        patches2d = jnp.pad(patches2d, ((0, M_pad - M), (0, K_pad - K)))

    w2d = conv_w.reshape(E, K).T.astype(compute_dtype)   # (K, E)
    if (K_pad, E_pad) != (K, E):
        w2d = jnp.pad(w2d, ((0, K_pad - K), (0, E_pad - E)))

    params = jnp.stack([conv_b, ln_gamma, ln_beta]).astype(jnp.float32)
    if E_pad != E:
        params = jnp.pad(params, ((0, 0), (0, E_pad - E)))   # (3, E_pad)

    kernel = functools.partial(_patch_embed_kernel, e_real=E)

    out2d = pl.pallas_call(
        kernel,
        out_shape=jax.ShapeDtypeStruct((M_pad, E_pad), out_dtype),
        grid_spec=pltpu.PrefetchScalarGridSpec(
            num_scalar_prefetch=0,
            grid=(M_pad // tm,),
            in_specs=[
                # Streamed M tiles of the patch matrix (double-buffered).
                pl.BlockSpec((tm, K_pad), lambda i: (i, 0)),
                # Grid-invariant operands: single buffer (constant index_map).
                pl.BlockSpec((K_pad, E_pad), lambda i: (0, 0),
                             pipeline_mode=pl.Buffered(1)),
                pl.BlockSpec((3, E_pad), lambda i: (0, 0),
                             pipeline_mode=pl.Buffered(1)),
            ],
            out_specs=pl.BlockSpec((tm, E_pad), lambda i: (i, 0)),
        ),
        compiler_params=pltpu.CompilerParams(
            dimension_semantics=("parallel",),
            vmem_limit_bytes=vmem_limit,
            allow_input_fusion=[True, False, False],
        ),
    )(patches2d, w2d, params)

    return out2d[:M, :E].reshape(B, num_patches, E)


if __name__ == "__main__":
    # Small shapes consistent with the module: img_size=16, patch_size=4,
    # in_channels=4, embed_dim=32, batch=2  -> num_patches = 16.
    B, C, H, W = 2, 4, 16, 16
    patch_size = 4
    embed_dim = 32
    num_patches = (H // patch_size) * (W // patch_size)

    key = jax.random.PRNGKey(0)
    kx, kw, kb, kg, kbt = jax.random.split(key, 5)

    x = jax.random.normal(kx, (B, C, H, W), dtype=jnp.float32)
    conv_w = 0.02 * jax.random.normal(
        kw, (embed_dim, C, patch_size, patch_size), dtype=jnp.float32)
    conv_b = 0.01 * jax.random.normal(kb, (embed_dim,), dtype=jnp.float32)
    ln_gamma = jnp.ones((embed_dim,), dtype=jnp.float32)
    ln_beta = jnp.zeros((embed_dim,), dtype=jnp.float32)

    def reference(matmul_dtype):
        # Pure-JAX reference: patchify + matmul (f32 accumulation) + two-pass LN.
        patches = _patchify_nchw(x.astype(matmul_dtype), patch_size)
        w2 = conv_w.reshape(embed_dim, -1).T.astype(matmul_dtype)
        y = jnp.dot(patches, w2, preferred_element_type=jnp.float32) + conv_b
        mu = y.mean(-1, keepdims=True)
        var = ((y - mu) ** 2).mean(-1, keepdims=True)
        return (y - mu) / jnp.sqrt(var + LN_EPS) * ln_gamma + ln_beta

    # Fast path (default): bf16 MXU operands, f32 accumulation + f32 LayerNorm.
    out_fast = patch_embedding(x, conv_w, conv_b, ln_gamma, ln_beta,
                               patch_size=patch_size)
    jax.block_until_ready(out_fast)
    assert out_fast.shape == (B, num_patches, embed_dim)
    assert jnp.allclose(out_fast, reference(jnp.bfloat16), atol=2e-2, rtol=2e-2)

    # Exact-precision path: keep operands in f32.
    out_f32 = patch_embedding(x, conv_w, conv_b, ln_gamma, ln_beta,
                              patch_size=patch_size, cast_to_bf16=False)
    jax.block_until_ready(out_f32)
    assert out_f32.shape == (B, num_patches, embed_dim)
    assert jnp.allclose(out_f32, reference(jnp.float32), atol=1e-4, rtol=1e-4)

    print("KERNEL_OK")
</pallas_src>

<mosaic_0001>
module attributes {stable_mosaic.version = 11 : i64} {
  func.func @_patch_embed_kernel(%arg0: i32, %arg1: memref<16x128xbf16, #tpu.memory_space<vmem>>, %arg2: memref<128x128xbf16, #tpu.memory_space<vmem>>, %arg3: memref<3x128xf32, #tpu.memory_space<vmem>>, %arg4: memref<16x128xf32, #tpu.memory_space<vmem>>) attributes {dimension_semantics = [#tpu.dimension_semantics<parallel>], iteration_bounds = array<i64: 2>, scalar_prefetch = 0 : i64, scratch_operands = 0 : i64, tpu.core_type = #tpu.core_type<tc>, window_params = [{transform_indices = @transform_0, window_bounds = array<i64: 16, 128>}, {pipeline_mode = #tpu.pipeline_mode<synchronous>, transform_indices = @transform_1, window_bounds = array<i64: 128, 128>}, {pipeline_mode = #tpu.pipeline_mode<synchronous>, transform_indices = @transform_2, window_bounds = array<i64: 3, 128>}, {transform_indices = @transform_3, window_bounds = array<i64: 16, 128>}]} {
    %c0 = arith.constant 0 : index
    %c0_0 = arith.constant 0 : index
    %0 = vector.load %arg1[%c0, %c0_0] : memref<16x128xbf16, #tpu.memory_space<vmem>>, vector<16x128xbf16>
    %c0_1 = arith.constant 0 : index
    %c0_2 = arith.constant 0 : index
    %1 = vector.load %arg2[%c0_1, %c0_2] : memref<128x128xbf16, #tpu.memory_space<vmem>>, vector<128x128xbf16>
    %cst = arith.constant dense<0.000000e+00> : vector<16x128xf32>
    %2 = tpu.matmul %0, %1, %cst {dimension_numbers = #tpu.dot_dimension_numbers<[1], [0], [0], [1], [0, 0, 1, 1], [], []>} : vector<16x128xbf16>, vector<128x128xbf16>, vector<16x128xf32> -> vector<16x128xf32>
    %c0_3 = arith.constant 0 : index
    %c0_4 = arith.constant 0 : index
    %3 = vector.load %arg3[%c0_3, %c0_4] : memref<3x128xf32, #tpu.memory_space<vmem>>, vector<3x128xf32>
    %4 = vector.extract_strided_slice %3 {offsets = [0, 0], sizes = [1, 128], strides = [1, 1]} : vector<3x128xf32> to vector<1x128xf32>
    %5 = vector.extract_strided_slice %3 {offsets = [1, 0], sizes = [1, 128], strides = [1, 1]} : vector<3x128xf32> to vector<1x128xf32>
    %6 = vector.extract_strided_slice %3 {offsets = [2, 0], sizes = [1, 128], strides = [1, 1]} : vector<3x128xf32> to vector<1x128xf32>
    %7 = vector.broadcast %4 : vector<1x128xf32> to vector<16x128xf32>
    %8 = arith.addf %2, %7 : vector<16x128xf32>
    %cst_5 = arith.constant dense<0.000000e+00> : vector<16xf32>
    %9 = vector.multi_reduction <add>, %8, %cst_5 [1] : vector<16x128xf32> to vector<16xf32>
    %10 = vector.shape_cast %9 : vector<16xf32> to vector<16x1xf32>
    %cst_6 = arith.constant 3.125000e-02 : f32
    %11 = vector.broadcast %cst_6 : f32 to vector<16x1xf32>
    %12 = arith.mulf %10, %11 : vector<16x1xf32>
    %13 = vector.broadcast %12 : vector<16x1xf32> to vector<16x128xf32>
    %14 = arith.subf %8, %13 : vector<16x128xf32>
    %15 = tpu.iota {dimensions = array<i32: 1>} : vector<16x128xi32>
    %c32_i32 = arith.constant 32 : i32
    %16 = vector.broadcast %c32_i32 : i32 to vector<16x128xi32>
    %17 = arith.cmpi slt, %15, %16 : vector<16x128xi32>
    %cst_7 = arith.constant 0.000000e+00 : f32
    %18 = vector.broadcast %cst_7 : f32 to vector<16x128xf32>
    %19 = arith.select %17, %14, %18 : vector<16x128xi1>, vector<16x128xf32>
    %20 = arith.mulf %19, %19 : vector<16x128xf32>
    %cst_8 = arith.constant dense<0.000000e+00> : vector<16xf32>
    %21 = vector.multi_reduction <add>, %20, %cst_8 [1] : vector<16x128xf32> to vector<16xf32>
    %22 = vector.shape_cast %21 : vector<16xf32> to vector<16x1xf32>
    %cst_9 = arith.constant 3.125000e-02 : f32
    %23 = vector.broadcast %cst_9 : f32 to vector<16x1xf32>
    %24 = arith.mulf %22, %23 : vector<16x1xf32>
    %cst_10 = arith.constant 9.99999974E-6 : f32
    %25 = vector.broadcast %cst_10 : f32 to vector<16x1xf32>
    %26 = arith.addf %24, %25 : vector<16x1xf32>
    %27 = math.rsqrt %26 : vector<16x1xf32>
    %28 = vector.broadcast %27 : vector<16x1xf32> to vector<16x128xf32>
    %29 = arith.mulf %19, %28 : vector<16x128xf32>
    %30 = vector.broadcast %5 : vector<1x128xf32> to vector<16x128xf32>
    %31 = arith.mulf %29, %30 : vector<16x128xf32>
    %32 = vector.broadcast %6 : vector<1x128xf32> to vector<16x128xf32>
    %33 = arith.addf %31, %32 : vector<16x128xf32>
    %c0_11 = arith.constant 0 : index
    %c0_12 = arith.constant 0 : index
    %34 = vector.load %arg4[%c0_11, %c0_12] : memref<16x128xf32, #tpu.memory_space<vmem>>, vector<16x128xf32>
    tpu.vector_store %arg4[%c0_11, %c0_12], %33 {strides = array<i32>} : memref<16x128xf32, #tpu.memory_space<vmem>>, vector<16x128xf32>,
    return
  }
  func.func @transform_0(%arg0: i32) -> (i32, i32) {
    %c0_i32 = arith.constant 0 : i32
    %c0_i32_0 = arith.constant 0 : i32
    return %arg0, %c0_i32 : i32, i32
  }
  func.func @transform_1(%arg0: i32) -> (i32, i32) {
    %c0_i32 = arith.constant 0 : i32
    %c0_i32_0 = arith.constant 0 : i32
    %c0_i32_1 = arith.constant 0 : i32
    return %c0_i32, %c0_i32_0 : i32, i32
  }
  func.func @transform_2(%arg0: i32) -> (i32, i32) {
    %c0_i32 = arith.constant 0 : i32
    %c0_i32_0 = arith.constant 0 : i32
    %c0_i32_1 = arith.constant 0 : i32
    return %c0_i32, %c0_i32_0 : i32, i32
  }
  func.func @transform_3(%arg0: i32) -> (i32, i32) {
    %c0_i32 = arith.constant 0 : i32
    %c0_i32_0 = arith.constant 0 : i32
    return %arg0, %c0_i32 : i32, i32
  }
}

</mosaic_0001>

<llo_original>
// kernel: patch_embedding.2
$region0: #{patch_embedding.2}
  #allocation0 [shape = 'u32[]', space=smem, size = 0x4, offset = 0x4, fixed_abs, tag = 'smem constant byte address 0x4 - core index']
  #allocation1 [shape = 'u32[144,128]{1,0:T(1,128)}', space=vmem, size = 0x12000, scoped, tag = 'internal scratch']
  #allocation2 [shape = 'u32[2048]{0}', space=vmem, size = 0x2000, scoped, tag = 'scoped memory for patch_embedding.2']
  #allocation3 [shape = 'u32[2048]{0}', space=vmem, size = 0x2000, scoped, tag = 'scoped memory for patch_embedding.2']
  #allocation4 [shape = 'u32[2048]{0}', space=vmem, size = 0x2000, scoped, tag = 'scoped memory for patch_embedding.2']
  #allocation5 [shape = 'u32[2048]{0}', space=vmem, size = 0x2000, scoped, tag = 'scoped memory for patch_embedding.2']
  #allocation6 [shape = 'u32[2048]{0}', space=vmem, size = 0x2000, scoped, tag = 'scoped memory for patch_embedding.2']
  %s0 = inlined_call_operand.vmem [shape: bf16[128,128], index: 0, kind: input, shape index: {}]
  %s1 = inlined_call_operand.vmem [shape: f32[3,128], index: 1, kind: input, shape index: {}]
  %s2 = inlined_call_operand.vmem [shape: bf16[32,64], index: 2, kind: input, shape index: {}]
  %s3 = inlined_call_operand.<no memory space> [shape: bf16[], index: 3, kind: input, shape index: {}]
  %s4 = inlined_call_operand.hbm [shape: f32[32,128], index: 4, kind: output, shape index: {}]
  %s5 = sld [smem:[#allocation0]]
  $region45: #{patch_embedding.2} parent=0
    _
  %s7 = ssub.s32 1, %s5
  %s8 = scalar_select 0, %s7, %s5
  %v9 = vstv %s3
  %v10 = vunpack.i.l.bf16 %v9
  %v12 = vunpack.i.h.bf16 %v9
  $region1: #{patch_embedding.2} parent=0
    #allocation7 [shape = 'u8[16384]{0}', space=vmem, size = 0x4000, scoped, tag = 'output window, operand 0']
    #allocation8 [shape = 's32[2]{0}', space=sflag, size = 0x8, scoped, tag = 'scoped memory for patch_embedding.2']
    %14 = vsyncpa [#allocation8], 0
    %s15 = scalar_lea.sflag [#allocation8], 1
    %16 = vsyncpa %s15, 0
    loop: start=0, step=1, limit=4
    $region2: #{patch_embedding.2} parent=1 // loop_pre_header
      _
    $region3: #{patch_embedding.2} parent=1 // loop_header
      %s18 = sphi 0, %s22
      %p19 = scmp.ge.s32.totalorder %s18, 4
      %s28 = sphi 0, %s30
      %s31 = sphi 0, %s28
      %s32 = sphi 0, %s31
      %s48 = sphi 0, %s32
      %s52 = sphi 0, %s52
      %s54 = sphi 0, %s52
      %s55 = sphi 0, %s54
      %s69 = sphi 0, %s55
      %s73 = sphi 0, %s73
      %s75 = sphi 0, %s73
      %s76 = sphi 0, %s75
      %s90 = sphi 0, %s76
      %s96 = sphi 0, %s98
      %s99 = sphi 0, %s96
      %s100 = sphi 0, %s99
      %s116 = sphi 0, %s100
    $region4: #{patch_embedding.2} parent=1 // loop_header_branch
      %21 = sbr.rel (%p19) target = $region8
    $region5: #{patch_embedding.2} parent=1 // loop_body
      %s23 = ssub.s32 %s18, 1
      %s24 = ssub.s32 %s18, 2
      %s25 = sadd.s32 %s18, 1
      %s26 = ssub.s32 %s18, %s25
      %p27 = scmp.eq.s32.totalorder %s26, 0
      %s29 = sadd.s32 %s28, 1
      %s30 = scalar_select %p27, %s28, %s29
      %p33 = pneg %p27
      %p34 = scmp.eq.s32.totalorder %s18, 1
      %p35 = por %p33, %p34
      %p36 = scmp.ne.s32.totalorder %s28, %s31
      %p37 = scmp.eq.s32.totalorder %s18, 0
      %p38 = por %p36, %p37
      %p39 = scmp.ne.s32.totalorder %s28, %s31
      %p40 = scmp.eq.s32.totalorder %s23, 1
      %p41 = por %p39, %p40
      %p42 = scmp.ne.s32.totalorder %s31, %s32
      %p43 = scmp.eq.s32.totalorder %s23, 0
      %p44 = por %p42, %p43
      %p45 = scmp.ne.s32.totalorder %s31, %s32
      %p46 = scmp.eq.s32.totalorder %s24, 1
      %p47 = por %p45, %p46
      %p49 = scmp.ne.s32.totalorder %s32, %s48
      %p50 = scmp.eq.s32.totalorder %s24, 0
      %p51 = por %p49, %p50
      %s53 = sadd.s32 %s52, 1
      %p56 = scmp.eq.s32.totalorder %s18, 1
      %p57 = scmp.ne.s32.totalorder %s52, %s54
      %p58 = scmp.eq.s32.totalorder %s18, 0
      %p59 = por %p57, %p58
      %p60 = scmp.ne.s32.totalorder %s52, %s54
      %p61 = scmp.eq.s32.totalorder %s23, 1
      %p62 = por %p60, %p61
      %p63 = scmp.ne.s32.totalorder %s54, %s55
      %p64 = scmp.eq.s32.totalorder %s23, 0
      %p65 = por %p63, %p64
      %p66 = scmp.ne.s32.totalorder %s54, %s55
      %p67 = scmp.eq.s32.totalorder %s24, 1
      %p68 = por %p66, %p67
      %p70 = scmp.ne.s32.totalorder %s55, %s69
      %p71 = scmp.eq.s32.totalorder %s24, 0
      %p72 = por %p70, %p71
      %s74 = sadd.s32 %s73, 1
      %p77 = scmp.eq.s32.totalorder %s18, 1
      %p78 = scmp.ne.s32.totalorder %s73, %s75
      %p79 = scmp.eq.s32.totalorder %s18, 0
      %p80 = por %p78, %p79
      %p81 = scmp.ne.s32.totalorder %s73, %s75
      %p82 = scmp.eq.s32.totalorder %s23, 1
      %p83 = por %p81, %p82
      %p84 = scmp.ne.s32.totalorder %s75, %s76
      %p85 = scmp.eq.s32.totalorder %s23, 0
      %p86 = por %p84, %p85
      %p87 = scmp.ne.s32.totalorder %s75, %s76
      %p88 = scmp.eq.s32.totalorder %s24, 1
      %p89 = por %p87, %p88
      %p91 = scmp.ne.s32.totalorder %s76, %s90
      %p92 = scmp.eq.s32.totalorder %s24, 0
      %p93 = por %p91, %p92
      %s94 = ssub.s32 %s18, %s25
      %p95 = scmp.eq.s32.totalorder %s94, 0
      %s97 = sadd.s32 %s96, 1
      %s98 = scalar_select %p95, %s96, %s97
      %p101 = pneg %p95
      %p102 = scmp.eq.s32.totalorder %s18, 1
      %p103 = por %p101, %p102
      %p104 = scmp.ne.s32.totalorder %s96, %s99
      %p105 = scmp.eq.s32.totalorder %s18, 0
      %p106 = por %p104, %p105
      %p107 = scmp.ne.s32.totalorder %s96, %s99
      %p108 = scmp.eq.s32.totalorder %s23, 1
      %p109 = por %p107, %p108
      %p110 = scmp.ne.s32.totalorder %s99, %s100
      %p111 = scmp.eq.s32.totalorder %s23, 0
      %p112 = por %p110, %p111
      %p113 = scmp.ne.s32.totalorder %s99, %s100
      %p114 = scmp.eq.s32.totalorder %s24, 1
      %p115 = por %p113, %p114
      %p117 = scmp.ne.s32.totalorder %s100, %s116
      %p118 = scmp.eq.s32.totalorder %s24, 0
      %p119 = por %p117, %p118
      %p120 = scmp.le.s32.totalorder 1, %s18
      %p121 = scmp.lt.s32.totalorder %s18, 3
      %p122 = pnand %p120, %p121
      %p123 = pneg %p122
      // Predicated region
      $region9: #{patch_embedding.2} parent=5 // pred_check
        _
      $region10: #{patch_embedding.2} parent=5 // pred_check_branch
        %125 = sbr.rel (%p122) target = $region12
      $region11: #{patch_embedding.2} parent=5 // pred_region
        %s126 = ssub.s32 %s18, 1
        // Predicated region
        $region13: #{patch_embedding.2} parent=11 // pred_check
          %p127 = pneg %p65
        $region14: #{patch_embedding.2} parent=11 // pred_check_branch
          %129 = sbr.rel (%p127) target = $region16
        $region15: #{patch_embedding.2} parent=11 // pred_region
          _
        $region16: #{patch_embedding.2} parent=11 // pred_fallthru
          _
        // Predicated region
        $region17: #{patch_embedding.2} parent=11 // pred_check
          %p130 = pneg %p86
        $region18: #{patch_embedding.2} parent=11 // pred_check_branch
          %132 = sbr.rel (%p130) target = $region20
        $region19: #{patch_embedding.2} parent=11 // pred_region
          _
        $region20: #{patch_embedding.2} parent=11 // pred_fallthru
          _
      $region12: #{patch_embedding.2} parent=5 // pred_fallthru
        _
      %p133 = scmp.lt.s32.totalorder %s18, 2
      // Predicated region
      $region21: #{patch_embedding.2} parent=5 // pred_check
        %p134 = pneg %p133
      $region22: #{patch_embedding.2} parent=5 // pred_check_branch
        %136 = sbr.rel (%p134) target = $region24
      $region23: #{patch_embedding.2} parent=5 // pred_region
        // Predicated region
        $region25: #{patch_embedding.2} parent=23 // pred_check
          %p137 = pneg %p38
        $region26: #{patch_embedding.2} parent=23 // pred_check_branch
          %139 = sbr.rel (%p137) target = $region28
        $region27: #{patch_embedding.2} parent=23 // pred_region
          %s140 = smul.u32 2, %s18
          %p141 = scmp.lt.s32.totalorder %s140, 3
          %s142 = scalar_select %p141, %s140, 3
          %s143 = smul.addr %s142, 4
          %s144 = scalar_lea.vmem %s2, %s143
          %s145 = smul.u32 2, %s18
        $region28: #{patch_embedding.2} parent=23 // pred_fallthru
          _
      $region24: #{patch_embedding.2} parent=5 // pred_fallthru
        _
      %p146 = scmp.le.s32.totalorder 1, %s18
      %p147 = scmp.lt.s32.totalorder %s18, 3
      %p148 = pnand %p146, %p147
      %p149 = pneg %p148
      // Predicated region
      $region29: #{patch_embedding.2} parent=5 // pred_check
        _
      $region30: #{patch_embedding.2} parent=5 // pred_check_branch
        %151 = sbr.rel (%p148) target = $region32
      $region31: #{patch_embedding.2} parent=5 // pred_region
        #allocation9 [shape = 'u8[4096]{0}', space=vmem, size = 0x1000, dematerialized = true, scoped, tag = 'FusionAdapter Buffer %fusion.1 = bf16[32,128]{1,0:T(8,128)(2,1)} fusion(%param_2.1, %param_3), kind=kLoop, calls=%fused_computation.2.clone, metadata={op_name="jit(patch_embedding)/jit(_pad)/pad" stack_frame_id=11}']
        %s152 = ssub.s32 %s18, 1
        %s153 = smul.u32 2, %s23
        %p154 = scmp.lt.s32.totalorder %s153, 3
        %s155 = scalar_select %p154, %s153, 3
        %s156 = smul.addr %s155, 4
        %s157 = scalar_lea.vmem %s2, %s156
        %p158 = pneg %p44
        %p159 = pneg %p41
        %p160 = pneg %p65
        %p161 = pneg %p62
        %p162 = pneg %p86
        %p163 = pneg %p83
        %p164 = pneg %p112
        %p165 = pneg %p109
        %s166 = sand.u32 %s99, 1
        %s167 = scalar_lea.sflag [#allocation8], %s166
        %s168 = sand.u32 %s99, 1
        %s169 = smul.addr %s168, 16
        %s170 = scalar_lea.vmem [#allocation7], %s169
        %s171 = smul.u32 2, %s23
        %p172 = scmp.lt.s32.totalorder %s171, 3
        %s173 = scalar_select %p172, %s171, 3
        %s174 = smul.addr %s173, 4
        %s175 = scalar_lea.vmem %s2, %s174
        %s176 = smul.u32 2, %s23
        %s177 = smul.u32 2, %s23
        %s179 = sor.u32 255, 127
        %s180 = sand.u32 %s179, 85
        %s181 = sshrl.u32 %s180, 1
        %s182 = sor.u32 %s180, %s181
        %s183 = sand.u32 51, %s182
        %s184 = sshrl.u32 %s183, 2
        %s185 = sor.u32 %s183, %s184
        %s186 = sand.u32 15, %s185
        %v187 = vld [vmem:[%s175] sm:%s186]
        %v188 = vunpack.c.l.bf16 %v187
        %v189 = vunpack.c.h.bf16 %v187
        %v190 = vlaneseq
        %v191 = vand.u32 %v190, 127
        %vm193 = vcmp.lt.s32.totalorder %v191, 64
        %v194 = vsel %vm193, %v188, %v10
        %v195 = vpack.c.bf16 0.0, %v194
        %197 = vst [vmem:[#allocation9] sm:$0xf] %v195
        %s198 = scalar_lea.vmem %s175, 4
        %s200 = sor.u32 255, 127
        %s201 = sand.u32 %s200, 85
        %s202 = sshrl.u32 %s201, 1
        %s203 = sor.u32 %s201, %s202
        %s204 = sand.u32 51, %s203
        %s205 = sshrl.u32 %s204, 2
        %s206 = sor.u32 %s204, %s205
        %s207 = sand.u32 15, %s206
        %v208 = vld [vmem:[%s198] sm:%s207]
        %v209 = vunpack.c.l.bf16 %v208
        %v210 = vunpack.c.h.bf16 %v208
        %v211 = vlaneseq
        %v212 = vand.u32 %v211, 127
        %vm214 = vcmp.lt.s32.totalorder %v212, 64
        %v215 = vsel %vm214, %v209, %v10
        %s216 = scalar_lea.vmem [#allocation9], 4
        %v217 = vpack.c.bf16 0.0, %v215
        %219 = vst [vmem:[%s216] sm:$0xf] %v217
        %v221 = vld [vmem:[#allocation9] sm:$0xf]
        %v222 = vld [vmem:[#allocation9 + $0x4] sm:$0xf]
        %v223 = vld [vmem:[%s0] sm:$0xf]
        %v224 = vld [vmem:[%s0 + $0x4] sm:$0xf]
        %v225 = vld [vmem:[%s0 + $0x8] sm:$0xf]
        %v226 = vld [vmem:[%s0 + $0xc] sm:$0xf]
        %v227 = vld [vmem:[%s0 + $0x10] sm:$0xf]
        %v228 = vld [vmem:[%s0 + $0x14] sm:$0xf]
        %v229 = vld [vmem:[%s0 + $0x18] sm:$0xf]
        %v230 = vld [vmem:[%s0 + $0x1c] sm:$0xf]
        %v231 = vld [vmem:[%s0 + $0x20] sm:$0xf]
        %v232 = vld [vmem:[%s0 + $0x24] sm:$0xf]
        %v233 = vld [vmem:[%s0 + $0x28] sm:$0xf]
        %v234 = vld [vmem:[%s0 + $0x2c] sm:$0xf]
        %v235 = vld [vmem:[%s0 + $0x30] sm:$0xf]
        %v236 = vld [vmem:[%s0 + $0x34] sm:$0xf]
        %v237 = vld [vmem:[%s0 + $0x38] sm:$0xf]
        %v238 = vld [vmem:[%s0 + $0x3c] sm:$0xf]
        %v239 = vld [vmem:[%s1] sm:$0x7]
        %v240 = vlaneseq
        %v241 = vshrl.u32 %v240, 7
        %v242 = vsub.s32 0, %v241
        %v243 = vrot.slane %v239, %v242
        %v246 = vunpack.c.l.b16 %v221
        %v247 = vunpack.c.l.b16 %v222
        %v248 = vpack.c.b16 %v247, %v246
        %v266 = vunpack.c.l.b16 %v223
        %v267 = vunpack.c.l.b16 %v224
        %v268 = vunpack.c.l.b16 %v225
        %v269 = vunpack.c.l.b16 %v226
        %v270 = vunpack.c.l.b16 %v227
        %v271 = vunpack.c.l.b16 %v228
        %v272 = vunpack.c.l.b16 %v229
        %v273 = vunpack.c.l.b16 %v230
        %v274 = vunpack.c.l.b16 %v231
        %v275 = vunpack.c.l.b16 %v232
        %v276 = vunpack.c.l.b16 %v233
        %v277 = vunpack.c.l.b16 %v234
        %v278 = vunpack.c.l.b16 %v235
        %v279 = vunpack.c.l.b16 %v236
        %v280 = vunpack.c.l.b16 %v237
        %v281 = vunpack.c.l.b16 %v238
        %v282 = vpack.c.b16 %v267, %v266
        %v283 = vpack.c.b16 %v269, %v268
        %v284 = vpack.c.b16 %v271, %v270
        %v285 = vpack.c.b16 %v273, %v272
        %v286 = vpack.c.b16 %v275, %v274
        %v287 = vpack.c.b16 %v277, %v276
        %v288 = vpack.c.b16 %v279, %v278
        %v289 = vpack.c.b16 %v281, %v280
        %298 = vmatprep.subr.bf16.mxu0 0
        %299 = vmatpush1.bf16.msra.mxu0 %v282
        %300 = vmatprep.subr.bf16.mxu0 0
        %301 = vmatpush1.bf16.msra.mxu0 %v283
        %302 = vmatprep.subr.bf16.mxu0 0
        %303 = vmatpush1.bf16.msra.mxu0 %v284
        %304 = vmatprep.subr.bf16.mxu0 0
        %305 = vmatpush1.bf16.msra.mxu0 %v285
        %306 = vmatprep.subr.bf16.mxu0 0
        %307 = vmatpush1.bf16.msra.mxu0 %v286
        %308 = vmatprep.subr.bf16.mxu0 0
        %309 = vmatpush1.bf16.msra.mxu0 %v287
        %310 = vmatprep.subr.bf16.mxu0 0
        %311 = vmatpush1.bf16.msra.mxu0 %v288
        %312 = vmatprep.subr.bf16.mxu0 0
        %313 = vmatpush1.bf16.msra.mxu0 %v289
        %314 = vmatprep.subr.bf16.mxu0 0
        %315 = vmatpush1.bf16.msra.mxu0 0
        %316 = vmatprep.subr.bf16.mxu0 0
        %317 = vmatpush1.bf16.msra.mxu0 0
        %318 = vmatprep.subr.bf16.mxu0 0
        %319 = vmatpush1.bf16.msra.mxu0 0
        %320 = vmatprep.subr.bf16.mxu0 0
        %321 = vmatpush1.bf16.msra.mxu0 0
        %322 = vmatprep.subr.bf16.mxu0 0
        %323 = vmatpush1.bf16.msra.mxu0 0
        %324 = vmatprep.subr.bf16.mxu0 0
        %325 = vmatpush1.bf16.msra.mxu0 0
        %326 = vmatprep.subr.bf16.mxu0 0
        %327 = vmatpush1.bf16.msra.mxu0 0
        %328 = vmatprep.subr.bf16.mxu0 0
        %329 = vmatpush1.bf16.msra.mxu0 0
        %330 = vmatprep.mubr.bf16.mxu0 0
        %331 = vmatmul.mubr.bf16.gmra.mrb[0].mxu0 %v248
        %v332 = vpop.f32.mrb[0].mxu0
        %v333 = vadd.f32 %v243, %v332
        %v334 = vpop.f32.mrb[0].mxu0
        %v335 = vpop.f32.mrb[0].mxu0
        %v336 = vadd.f32 %v243, %v335
        %v337 = vpop.f32.mrb[0].mxu0
        %338 = vdwg.mxu0
        %339 = vadd.xlane.f32.xlu0 %v333
        %v340 = vpop.xlane.xlu0 %339
        %341 = vadd.xlane.f32.xlu0 %v336
        %v342 = vpop.xlane.xlu0 %341
        %v343 = vmul.f32 %v340, 0.03125
        %v344 = vmul.f32 %v342, 0.03125
        %v345 = vsub.f32 %v333, %v343
        %v346 = vsub.f32 %v336, %v344
        %v347 = vlaneseq
        %v348 = vand.u32 %v347, 127
        %vm349 = vcmp.lt.s32.totalorder %v348, 32
        %v350 = vsel %vm349, %v345, 0.0
        %v351 = vsel %vm349, %v346, 0.0
        %v352 = vmul.f32 %v350, %v350
        %v353 = vmul.f32 %v351, %v351
        %354 = vadd.xlane.f32.xlu0 %v352
        %v355 = vpop.xlane.xlu0 %354
        %356 = vadd.xlane.f32.xlu0 %v353
        %v357 = vpop.xlane.xlu0 %356
        %v358 = vmul.f32 %v355, 0.03125
        %v359 = vmul.f32 %v357, 0.03125
        %v360 = vadd.f32 %v358, 1e-05
        %v361 = vadd.f32 %v359, 1e-05
        %v362 = vrsqrt.pop %v360
        %v363 = vrsqrt.pop %v361
        %v364 = vmul.f32 %v350, %v362
        %v365 = vmul.f32 %v351, %v363
        %v366 = vlaneseq
        %v367 = vshrl.u32 %v366, 7
        %v368 = vsub.s32 1, %v367
        %v369 = vrot.slane %v239, %v368
        %v370 = vmul.f32 %v364, %v369
        %v371 = vmul.f32 %v365, %v369
        %v372 = vlaneseq
        %v373 = vshrl.u32 %v372, 7
        %v374 = vsub.s32 2, %v373
        %v375 = vrot.slane %v239, %v374
        %v376 = vadd.f32 %v370, %v375
        %v377 = vadd.f32 %v371, %v375
        %378 = vst [vmem:[%s170] sm:$0xff] %v376
        %379 = vst [vmem:[%s170 + $0x8] sm:$0xff] %v377
        %s380 = sand.u32 %s99, 1
        %s381 = scalar_lea.sflag [#allocation8], %s380
        %s382 = sand.u32 %s99, 1
        %s383 = smul.addr %s382, 16
        %s384 = scalar_lea.vmem [#allocation7], %s383
        // Predicated region
        $region33: #{patch_embedding.2} parent=31 // pred_check
          %p385 = pneg %p109
        $region34: #{patch_embedding.2} parent=31 // pred_check_branch
          %387 = sbr.rel (%p385) target = $region36
        $region35: #{patch_embedding.2} parent=31 // pred_region
          %s388 = smul.u32 2, %s23
          %s390 = ssub.s32 256, 256
          %391 = vsyncadd %s381, %s390
          %s392 = smul.addr %s388, 128
          %s393 = scalar_lea.hbm %s4, %s392
          %s394 = sshll.u32 %s384, 4
          %s395 = int_to_ptr.vmem [resolvable:$true] %s394
          %400 = dma.vmem_to_hbm [thread:$0]  %s395, 256, %s393, %s381, 128, 128, 8
        $region36: #{patch_embedding.2} parent=31 // pred_fallthru
          _
      $region32: #{patch_embedding.2} parent=5 // pred_fallthru
        _
      %p401 = scmp.le.s32.totalorder 2, %s18
      // Predicated region
      $region37: #{patch_embedding.2} parent=5 // pred_check
        %p402 = pneg %p401
      $region38: #{patch_embedding.2} parent=5 // pred_check_branch
        %404 = sbr.rel (%p402) target = $region40
      $region39: #{patch_embedding.2} parent=5 // pred_region
        %s405 = ssub.s32 %s18, 2
        // Predicated region
        $region41: #{patch_embedding.2} parent=39 // pred_check
          %p406 = pneg %p115
        $region42: #{patch_embedding.2} parent=39 // pred_check_branch
          %408 = sbr.rel (%p406) target = $region44
        $region43: #{patch_embedding.2} parent=39 // pred_region
          %s409 = sand.u32 %s100, 1
          %s410 = scalar_lea.sflag [#allocation8], %s409
          %s411 = sand.u32 %s100, 1
          %s412 = smul.addr %s411, 16
          %s413 = scalar_lea.vmem [#allocation7], %s412
          %414 = dma.done %s410, 256
        $region44: #{patch_embedding.2} parent=39 // pred_fallthru
          _
      $region40: #{patch_embedding.2} parent=5 // pred_fallthru
        _
    $region6: #{patch_embedding.2} parent=1 // loop_footer
      %s22 = sadd.s32 1, %s18
    $region7: #{patch_embedding.2} parent=1 // loop_footer_branch
      %17 = sbr.rel target = $region3
    $region8: #{patch_embedding.2} parent=1 // loop_exit
      _
    %415 = vsyncpa [#allocation8], 1
    %s416 = scalar_lea.sflag [#allocation8], 1
    %417 = vsyncpa %s416, 1

</llo_original>
